<compile_context>
chip_gen: v7x
topology: tpu7x:2x2x1
jax: 0.10.0
libtpu: 0.0.40
codegen_flags: <defaults>
</compile_context>

<pallas_src>
import math

import jax
import jax.numpy as jnp
from jax import lax
from jax.experimental import pallas as pl
from jax.experimental.pallas import tpu as pltpu


# ----------------------------------------------------------------------------
# Kernels
# ----------------------------------------------------------------------------
def _conv1d_gemm_kernel_single(w_ref, x_ref, b_ref, o_ref):
    """Grid = (N, C_out tiles, T tiles). Contraction fits a single tile.

    w_ref: (TCO, CKp)     full (padded) flattened weight tile
    x_ref: (1, CKp, TT)   im2col input tile
    b_ref: (TCO, 1)       bias column
    o_ref: (1, TCO, TT)   output tile (lane-dense: TT is a multiple of 128)
    """
    acc = jnp.dot(w_ref[...], x_ref[0], preferred_element_type=jnp.float32)
    o_ref[0] = (acc + b_ref[...].astype(jnp.float32)).astype(o_ref.dtype)


def _conv1d_gemm_kernel_multi(w_ref, x_ref, b_ref, o_ref, acc_ref):
    """Grid = (N, C_out tiles, T tiles, contraction tiles).

    w_ref:   (TCO, TCI)      weight tile
    x_ref:   (1, TCI, TT)    im2col input tile (batch dim kept as size-1)
    b_ref:   (TCO, 1)        bias column
    o_ref:   (1, TCO, TT)    output tile (lane-dense: TT is a multiple of 128)
    acc_ref: (TCO, TT) f32   VMEM accumulator, resident across the ct axis
    """
    ct = pl.program_id(3)

    @pl.when(ct == 0)
    def _init():
        acc_ref[...] = jnp.zeros_like(acc_ref)

    # MXU matmul, accumulate in float32 (no materialized f32 copy of the inputs).
    acc_ref[...] += jnp.dot(
        w_ref[...], x_ref[0], preferred_element_type=jnp.float32
    )

    @pl.when(ct == pl.num_programs(3) - 1)
    def _finalize():
        o_ref[0] = (
            acc_ref[...] + b_ref[...].astype(jnp.float32)
        ).astype(o_ref.dtype)


# ----------------------------------------------------------------------------
# VMEM-budget-aware tile selection
# ----------------------------------------------------------------------------
def _round_up(x, m):
    return (x + m - 1) // m * m


def _choose_tiles(c_out, ck, t_out, itemsize, budget_bytes):
    """Pick (TCO, C_out_pad, TCI, CK_pad, TT, T_out_pad).

    Budget counts double-buffered input/weight/output blocks plus the f32
    accumulator; the default 8 MiB keeps us inside v5e's 16 MiB scoped VMEM and
    well inside v6e (128 MiB) / v7x (64 MiB) while still giving multi-MiB,
    pipelinable DMA tiles.
    """
    # Output-channel tile (sublane dim of the output block): multiple of 8.
    c_out_p = _round_up(c_out, 8)
    if c_out_p <= 256:
        tco = c_out_p
    else:
        tco = 256
        c_out_p = _round_up(c_out_p, tco)

    # Time tile (lane dim): multiple of 128 (unmasked stores), capped at 512,
    # picked to minimize time-axis zero padding.
    t128 = _round_up(t_out, 128)
    if t128 <= 512:
        tt = t128
    else:
        tt, best_pad = 128, None
        for cand in range(512, 127, -128):
            padded = _round_up(t_out, cand)
            if best_pad is None or padded < best_pad:
                tt, best_pad = cand, padded

    # Contraction tile: full (padded to 8) when small, else multiples of 128.
    ck8 = _round_up(ck, 8)
    tci = ck8 if ck8 <= 1024 else 512

    def working_set(a_tco, a_tci, a_tt):
        x_blk = a_tci * a_tt * itemsize * 2      # double-buffered input block
        w_blk = a_tco * a_tci * itemsize * 2     # double-buffered weight block
        o_blk = a_tco * a_tt * itemsize * 2      # double-buffered output block
        acc = a_tco * a_tt * 4                   # f32 accumulator scratch
        return x_blk + w_blk + o_blk + acc

    while working_set(tco, tci, tt) > budget_bytes and tt > 128:
        tt = max(128, tt - 128)
    while working_set(tco, tci, tt) > budget_bytes and tci > 128:
        tci = max(128, _round_up(tci // 2, 128))

    ck_p = _round_up(ck, tci)
    t_out_p = _round_up(t_out, tt)
    return tco, c_out_p, tci, ck_p, tt, t_out_p


# ----------------------------------------------------------------------------
# Forward pass (ConvNorm semantics: Conv1d, NCL layout)
# ----------------------------------------------------------------------------
def conv_norm_forward(x, weight, bias=None, *, stride=1, padding=None,
                      dilation=1, vmem_budget_bytes=8 * 1024 * 1024):
    """x: (N, C_in, T); weight: (C_out, C_in, K); bias: (C_out,) or None."""
    N, C_in, T = x.shape
    C_out, C_in_w, K = weight.shape
    assert C_in_w == C_in, "channel mismatch"
    if padding is None:
        assert K % 2 == 1
        padding = int(dilation * (K - 1) / 2)

    T_out = (T + 2 * padding - dilation * (K - 1) - 1) // stride + 1
    assert T_out > 0
    out_dtype = x.dtype

    # ---- layout glue (plain JAX): pad time + (strided) im2col over K taps ---
    x_pad = jnp.pad(x, ((0, 0), (0, 0), (padding, padding)))
    if K == 1 and stride == 1:
        x_col = x_pad[:, :, :T_out]                       # (N, C_in, T_out)
        w_flat = weight[:, :, 0]                          # (C_out, C_in)
    else:
        taps = [
            lax.slice_in_dim(
                x_pad, k * dilation, k * dilation + stride * (T_out - 1) + 1,
                stride=stride, axis=2)
            for k in range(K)
        ]
        x_col = jnp.concatenate(taps, axis=1)             # (N, K*C_in, T_out)
        w_flat = jnp.transpose(weight, (0, 2, 1)).reshape(C_out, K * C_in)

    CK = x_col.shape[1]
    if bias is None:
        bias = jnp.zeros((C_out,), dtype=out_dtype)

    # ---- tile selection -----------------------------------------------------
    itemsize = jnp.dtype(x.dtype).itemsize
    TCO, C_out_p, TCI, CK_p, TT, T_out_p = _choose_tiles(
        C_out, CK, T_out, itemsize, vmem_budget_bytes)

    # ---- zero-pad operands so every block is full (zeros are inert) ---------
    w_p = jnp.pad(w_flat, ((0, C_out_p - C_out), (0, CK_p - CK)))
    x_p = jnp.pad(x_col, ((0, 0), (0, CK_p - CK), (0, T_out_p - T_out)))
    b_p = jnp.pad(bias, (0, C_out_p - C_out)).reshape(C_out_p, 1)

    n_ct = CK_p // TCI

    if n_ct == 1:
        # Common case (e.g. default kernel_size=1): no accumulator round-trip,
        # 3-D fully parallel grid, single MXU pass per output tile.
        grid = (N, C_out_p // TCO, T_out_p // TT)
        out = pl.pallas_call(
            _conv1d_gemm_kernel_single,
            out_shape=jax.ShapeDtypeStruct((N, C_out_p, T_out_p), out_dtype),
            grid_spec=pltpu.PrefetchScalarGridSpec(
                num_scalar_prefetch=0,
                grid=grid,
                in_specs=[
                    pl.BlockSpec((TCO, CK_p), lambda n, co, t: (co, 0)),
                    pl.BlockSpec((1, CK_p, TT), lambda n, co, t: (n, 0, t)),
                    pl.BlockSpec((TCO, 1), lambda n, co, t: (co, 0)),
                ],
                out_specs=pl.BlockSpec((1, TCO, TT), lambda n, co, t: (n, co, t)),
            ),
            compiler_params=pltpu.CompilerParams(
                dimension_semantics=("parallel", "parallel", "parallel")
            ),
        )(w_p, x_p, b_p)
    else:
        grid = (N, C_out_p // TCO, T_out_p // TT, n_ct)
        out = pl.pallas_call(
            _conv1d_gemm_kernel_multi,
            out_shape=jax.ShapeDtypeStruct((N, C_out_p, T_out_p), out_dtype),
            grid_spec=pltpu.PrefetchScalarGridSpec(
                num_scalar_prefetch=0,
                grid=grid,
                in_specs=[
                    pl.BlockSpec((TCO, TCI), lambda n, co, t, ct: (co, ct)),
                    pl.BlockSpec((1, TCI, TT), lambda n, co, t, ct: (n, ct, t)),
                    pl.BlockSpec((TCO, 1), lambda n, co, t, ct: (co, 0)),
                ],
                out_specs=pl.BlockSpec(
                    (1, TCO, TT), lambda n, co, t, ct: (n, co, t)),
                scratch_shapes=[pltpu.VMEM((TCO, TT), jnp.float32)],
            ),
            compiler_params=pltpu.CompilerParams(
                dimension_semantics=("parallel", "parallel", "parallel",
                                     "arbitrary")
            ),
        )(w_p, x_p, b_p)

    return out[:, :C_out, :T_out]


# ----------------------------------------------------------------------------
# Module-style wrapper mirroring the PyTorch ConvNorm
# ----------------------------------------------------------------------------
class ConvNorm:
    def __init__(self, in_channels, out_channels, kernel_size=1, stride=1,
                 padding=None, dilation=1, bias=True, spectral_norm=False,
                 *, key, dtype=jnp.float32):
        if padding is None:
            assert kernel_size % 2 == 1
            padding = int(dilation * (kernel_size - 1) / 2)
        self.stride = stride
        self.padding = padding
        self.dilation = dilation
        # TODO(synk): spectral_norm only reparameterizes the weight during training;
        # the plain-weight forward implemented here matches spectral_norm=False.
        kw, kb = jax.random.split(key)
        fan_in = in_channels * kernel_size
        bound = 1.0 / math.sqrt(fan_in)
        self.weight = jax.random.uniform(
            kw, (out_channels, in_channels, kernel_size), dtype, -bound, bound)
        self.bias = (
            jax.random.uniform(kb, (out_channels,), dtype, -bound, bound)
            if bias else None)

    def __call__(self, x):
        return conv_norm_forward(
            x, self.weight, self.bias,
            stride=self.stride, padding=self.padding, dilation=self.dilation)


# ----------------------------------------------------------------------------
# Demo / correctness check
# ----------------------------------------------------------------------------
def _ref_conv1d(x, w, b, *, stride=1, dilation=1, padding=None):
    if padding is None:
        padding = dilation * (w.shape[2] - 1) // 2
    y = lax.conv_general_dilated(
        x, w, window_strides=(stride,), padding=[(padding, padding)],
        rhs_dilation=(dilation,),
        dimension_numbers=("NCH", "OIH", "NCH"),
        precision=lax.Precision.HIGHEST)
    return y + b[None, :, None]


if __name__ == "__main__":
    key = jax.random.PRNGKey(0)
    kx, km1, kw2, kw3 = jax.random.split(key, 4)

    N, C_in, T = 2, 16, 50
    x = jax.random.normal(kx, (N, C_in, T), dtype=jnp.float32)

    # Case 1: ConvNorm defaults (kernel_size=1 -> pointwise conv), module-style.
    conv1 = ConvNorm(C_in, 32, key=km1)
    y1 = jax.block_until_ready(conv1(x))
    r1 = _ref_conv1d(x, conv1.weight, conv1.bias)

    # Case 2: kernel_size=3, 'same' padding, explicit weights.
    C_out2, K2 = 24, 3
    w2 = 0.1 * jax.random.normal(kw2, (C_out2, C_in, K2), dtype=jnp.float32)
    b2 = jnp.zeros((C_out2,), dtype=jnp.float32)
    y2 = jax.block_until_ready(conv_norm_forward(x, w2, b2))
    r2 = _ref_conv1d(x, w2, b2)

    # Case 3: kernel_size=3, stride=2, explicit padding=1.
    C_out3, K3, stride3, pad3 = 20, 3, 2, 1
    w3 = 0.1 * jax.random.normal(kw3, (C_out3, C_in, K3), dtype=jnp.float32)
    b3 = jnp.ones((C_out3,), dtype=jnp.float32) * 0.5
    y3 = jax.block_until_ready(
        conv_norm_forward(x, w3, b3, stride=stride3, padding=pad3))
    r3 = _ref_conv1d(x, w3, b3, stride=stride3, padding=pad3)

    assert y1.shape == r1.shape == (N, 32, T), (y1.shape, r1.shape)
    assert y2.shape == r2.shape == (N, C_out2, T), (y2.shape, r2.shape)
    assert y3.shape == r3.shape, (y3.shape, r3.shape)
    assert jnp.allclose(y1, r1, atol=2e-3, rtol=2e-3), "mismatch vs reference (K=1)"
    assert jnp.allclose(y2, r2, atol=2e-3, rtol=2e-3), "mismatch vs reference (K=3)"
    assert jnp.allclose(y3, r3, atol=2e-3, rtol=2e-3), "mismatch vs reference (K=3,s=2)"

    print("KERNEL_OK")
</pallas_src>

<mosaic_0001>
module attributes {stable_mosaic.version = 11 : i64} {
  func.func @_conv1d_gemm_kernel_single(%arg0: i32, %arg1: i32, %arg2: i32, %arg3: memref<32x16xf32, #tpu.memory_space<vmem>>, %arg4: memref<1x16x128xf32, #tpu.memory_space<vmem>>, %arg5: memref<32x1xf32, #tpu.memory_space<vmem>>, %arg6: memref<1x32x128xf32, #tpu.memory_space<vmem>>) attributes {dimension_semantics = [#tpu.dimension_semantics<parallel>, #tpu.dimension_semantics<parallel>, #tpu.dimension_semantics<parallel>], iteration_bounds = array<i64: 2, 1, 1>, scalar_prefetch = 0 : i64, scratch_operands = 0 : i64, tpu.core_type = #tpu.core_type<tc>, window_params = [{transform_indices = @transform_0, window_bounds = array<i64: 32, 16>}, {transform_indices = @transform_1, window_bounds = array<i64: 1, 16, 128>}, {transform_indices = @transform_2, window_bounds = array<i64: 32, 1>}, {transform_indices = @transform_3, window_bounds = array<i64: 1, 32, 128>}]} {
    %c0 = arith.constant 0 : index
    %c0_0 = arith.constant 0 : index
    %0 = vector.load %arg3[%c0, %c0_0] : memref<32x16xf32, #tpu.memory_space<vmem>>, vector<32x16xf32>
    %c0_1 = arith.constant 0 : index
    %c0_2 = arith.constant 0 : index
    %c0_3 = arith.constant 0 : index
    %1 = vector.load %arg4[%c0_1, %c0_2, %c0_3] : memref<1x16x128xf32, #tpu.memory_space<vmem>>, vector<1x16x128xf32>
    %2 = vector.shape_cast %1 : vector<1x16x128xf32> to vector<16x128xf32>
    %cst = arith.constant dense<0.000000e+00> : vector<32x128xf32>
    %3 = tpu.matmul %0, %2, %cst {dimension_numbers = #tpu.dot_dimension_numbers<[1], [0], [0], [1], [0, 0, 1, 1], [], []>} : vector<32x16xf32>, vector<16x128xf32>, vector<32x128xf32> -> vector<32x128xf32>
    %c0_4 = arith.constant 0 : index
    %c0_5 = arith.constant 0 : index
    %4 = vector.load %arg5[%c0_4, %c0_5] : memref<32x1xf32, #tpu.memory_space<vmem>>, vector<32x1xf32>
    %5 = vector.broadcast %4 : vector<32x1xf32> to vector<32x128xf32>
    %6 = arith.addf %3, %5 : vector<32x128xf32>
    %c0_6 = arith.constant 0 : index
    %c0_7 = arith.constant 0 : index
    %c0_8 = arith.constant 0 : index
    %7 = vector.load %arg6[%c0_6, %c0_7, %c0_8] : memref<1x32x128xf32, #tpu.memory_space<vmem>>, vector<1x32x128xf32>
    %8 = vector.shape_cast %7 : vector<1x32x128xf32> to vector<32x128xf32>
    %9 = vector.shape_cast %6 : vector<32x128xf32> to vector<1x32x128xf32>
    tpu.vector_store %arg6[%c0_6, %c0_7, %c0_8], %9 {strides = array<i32>} : memref<1x32x128xf32, #tpu.memory_space<vmem>>, vector<1x32x128xf32>,
    return
  }
  func.func @transform_0(%arg0: i32, %arg1: i32, %arg2: i32) -> (i32, i32) {
    %c0_i32 = arith.constant 0 : i32
    %c0_i32_0 = arith.constant 0 : i32
    return %arg1, %c0_i32 : i32, i32
  }
  func.func @transform_1(%arg0: i32, %arg1: i32, %arg2: i32) -> (i32, i32, i32) {
    %c0_i32 = arith.constant 0 : i32
    %c0_i32_0 = arith.constant 0 : i32
    return %arg0, %c0_i32, %arg2 : i32, i32, i32
  }
  func.func @transform_2(%arg0: i32, %arg1: i32, %arg2: i32) -> (i32, i32) {
    %c0_i32 = arith.constant 0 : i32
    %c0_i32_0 = arith.constant 0 : i32
    return %arg1, %c0_i32 : i32, i32
  }
  func.func @transform_3(%arg0: i32, %arg1: i32, %arg2: i32) -> (i32, i32, i32) {
    %c0_i32 = arith.constant 0 : i32
    return %arg0, %arg1, %arg2 : i32, i32, i32
  }
}

</mosaic_0001>

<llo_original>
// kernel: tpu_custom_call.1
$region0: #{tpu_custom_call.1}
  #allocation0 [shape = 'u32[]', space=smem, size = 0x4, offset = 0x4, fixed_abs, tag = 'smem constant byte address 0x4 - core index']
  #allocation1 [shape = 'u32[144,128]{1,0:T(1,128)}', space=vmem, size = 0x12000, scoped, tag = 'internal scratch']
  %s0 = inlined_call_operand.vmem [shape: f32[32,16], index: 0, kind: input, shape index: {}]
  %s1 = inlined_call_operand.vmem [shape: f32[2,16,128], index: 1, kind: input, shape index: {}]
  %s2 = inlined_call_operand.vmem [shape: f32[32,1], index: 2, kind: input, shape index: {}]
  %s3 = inlined_call_operand.hbm [shape: f32[2,32,128], index: 3, kind: output, shape index: {}]
  %s4 = sld [smem:[#allocation0]]
  $region45: #{tpu_custom_call.1} parent=0
    _
  %s6 = ssub.s32 1, %s4
  %s7 = scalar_select 0, %s6, %s4
  $region1: #{tpu_custom_call.1} parent=0
    #allocation2 [shape = 'u8[32768]{0}', space=vmem, size = 0x8000, scoped, tag = 'output window, operand 0']
    #allocation3 [shape = 's32[2]{0}', space=sflag, size = 0x8, scoped, tag = 'scoped memory for tpu_custom_call.1']
    %8 = vsyncpa [#allocation3], 0
    %s9 = scalar_lea.sflag [#allocation3], 1
    %10 = vsyncpa %s9, 0
    loop: start=0, step=1, limit=4
    $region2: #{tpu_custom_call.1} parent=1 // loop_pre_header
      _
    $region3: #{tpu_custom_call.1} parent=1 // loop_header
      %s12 = sphi 0, %s16
      %p13 = scmp.ge.s32.totalorder %s12, 4
      %s19 = sphi 0, %s38
      %s20 = sphi 0, %s34
      %s21 = sphi 0, %s30
      %s22 = sphi 0, %s19
      %s23 = sphi 0, %s20
      %s24 = sphi 0, %s21
      %s25 = sphi 0, %s22
      %s26 = sphi 0, %s23
      %s27 = sphi 0, %s24
      %s41 = sphi 0, %s43
      %s44 = sphi 0, %s41
      %s45 = sphi 0, %s44
      %s61 = sphi 0, %s45
      %s69 = sphi 0, %s71
      %s72 = sphi 0, %s69
      %s73 = sphi 0, %s72
      %s89 = sphi 0, %s73
      %s95 = sphi 0, %s97
      %s98 = sphi 0, %s95
      %s99 = sphi 0, %s98
      %s115 = sphi 0, %s99
      %s125 = sphi 0, %s127
      %s128 = sphi 0, %s125
      %s129 = sphi 0, %s128
      %s145 = sphi 0, %s129
    $region4: #{tpu_custom_call.1} parent=1 // loop_header_branch
      %15 = sbr.rel (%p13) target = $region8
    $region5: #{tpu_custom_call.1} parent=1 // loop_body
      %s17 = ssub.s32 %s12, 1
      %s18 = ssub.s32 %s12, 2
      %s28 = sadd.s32 1, %s21
      %p29 = scmp.ge.s32.totalorder %s28, 1
      %s30 = scalar_select %p29, 0, %s28
      %s31 = sadd.s32 1, %s20
      %s32 = scalar_select %p29, %s31, %s20
      %p33 = scmp.ge.s32.totalorder %s32, 1
      %s34 = scalar_select %p33, 0, %s32
      %s35 = sadd.s32 1, %s19
      %s36 = scalar_select %p33, %s35, %s19
      %p37 = scmp.ge.s32.totalorder %s36, 2
      %s38 = scalar_select %p37, 0, %s36
      %s39 = ssub.s32 %s20, %s34
      %p40 = scmp.eq.s32.totalorder %s39, 0
      %s42 = sadd.s32 %s41, 1
      %s43 = scalar_select %p40, %s41, %s42
      %p46 = pneg %p40
      %p47 = scmp.eq.s32.totalorder %s12, 1
      %p48 = por %p46, %p47
      %p49 = scmp.ne.s32.totalorder %s41, %s44
      %p50 = scmp.eq.s32.totalorder %s12, 0
      %p51 = por %p49, %p50
      %p52 = scmp.ne.s32.totalorder %s41, %s44
      %p53 = scmp.eq.s32.totalorder %s17, 1
      %p54 = por %p52, %p53
      %p55 = scmp.ne.s32.totalorder %s44, %s45
      %p56 = scmp.eq.s32.totalorder %s17, 0
      %p57 = por %p55, %p56
      %p58 = scmp.ne.s32.totalorder %s44, %s45
      %p59 = scmp.eq.s32.totalorder %s18, 1
      %p60 = por %p58, %p59
      %p62 = scmp.ne.s32.totalorder %s45, %s61
      %p63 = scmp.eq.s32.totalorder %s18, 0
      %p64 = por %p62, %p63
      %s65 = ssub.s32 %s19, %s38
      %s66 = ssub.s32 %s21, %s30
      %s67 = sor.u32 %s65, %s66
      %p68 = scmp.eq.s32.totalorder %s67, 0
      %s70 = sadd.s32 %s69, 1
      %s71 = scalar_select %p68, %s69, %s70
      %p74 = pneg %p68
      %p75 = scmp.eq.s32.totalorder %s12, 1
      %p76 = por %p74, %p75
      %p77 = scmp.ne.s32.totalorder %s69, %s72
      %p78 = scmp.eq.s32.totalorder %s12, 0
      %p79 = por %p77, %p78
      %p80 = scmp.ne.s32.totalorder %s69, %s72
      %p81 = scmp.eq.s32.totalorder %s17, 1
      %p82 = por %p80, %p81
      %p83 = scmp.ne.s32.totalorder %s72, %s73
      %p84 = scmp.eq.s32.totalorder %s17, 0
      %p85 = por %p83, %p84
      %p86 = scmp.ne.s32.totalorder %s72, %s73
      %p87 = scmp.eq.s32.totalorder %s18, 1
      %p88 = por %p86, %p87
      %p90 = scmp.ne.s32.totalorder %s73, %s89
      %p91 = scmp.eq.s32.totalorder %s18, 0
      %p92 = por %p90, %p91
      %s93 = ssub.s32 %s20, %s34
      %p94 = scmp.eq.s32.totalorder %s93, 0
      %s96 = sadd.s32 %s95, 1
      %s97 = scalar_select %p94, %s95, %s96
      %p100 = pneg %p94
      %p101 = scmp.eq.s32.totalorder %s12, 1
      %p102 = por %p100, %p101
      %p103 = scmp.ne.s32.totalorder %s95, %s98
      %p104 = scmp.eq.s32.totalorder %s12, 0
      %p105 = por %p103, %p104
      %p106 = scmp.ne.s32.totalorder %s95, %s98
      %p107 = scmp.eq.s32.totalorder %s17, 1
      %p108 = por %p106, %p107
      %p109 = scmp.ne.s32.totalorder %s98, %s99
      %p110 = scmp.eq.s32.totalorder %s17, 0
      %p111 = por %p109, %p110
      %p112 = scmp.ne.s32.totalorder %s98, %s99
      %p113 = scmp.eq.s32.totalorder %s18, 1
      %p114 = por %p112, %p113
      %p116 = scmp.ne.s32.totalorder %s99, %s115
      %p117 = scmp.eq.s32.totalorder %s18, 0
      %p118 = por %p116, %p117
      %s119 = ssub.s32 %s19, %s38
      %s120 = ssub.s32 %s20, %s34
      %s121 = sor.u32 %s119, %s120
      %s122 = ssub.s32 %s21, %s30
      %s123 = sor.u32 %s121, %s122
      %p124 = scmp.eq.s32.totalorder %s123, 0
      %s126 = sadd.s32 %s125, 1
      %s127 = scalar_select %p124, %s125, %s126
      %p130 = pneg %p124
      %p131 = scmp.eq.s32.totalorder %s12, 1
      %p132 = por %p130, %p131
      %p133 = scmp.ne.s32.totalorder %s125, %s128
      %p134 = scmp.eq.s32.totalorder %s12, 0
      %p135 = por %p133, %p134
      %p136 = scmp.ne.s32.totalorder %s125, %s128
      %p137 = scmp.eq.s32.totalorder %s17, 1
      %p138 = por %p136, %p137
      %p139 = scmp.ne.s32.totalorder %s128, %s129
      %p140 = scmp.eq.s32.totalorder %s17, 0
      %p141 = por %p139, %p140
      %p142 = scmp.ne.s32.totalorder %s128, %s129
      %p143 = scmp.eq.s32.totalorder %s18, 1
      %p144 = por %p142, %p143
      %p146 = scmp.ne.s32.totalorder %s129, %s145
      %p147 = scmp.eq.s32.totalorder %s18, 0
      %p148 = por %p146, %p147
      %p149 = scmp.le.s32.totalorder 1, %s12
      %p150 = scmp.lt.s32.totalorder %s12, 3
      %p151 = pnand %p149, %p150
      %p152 = pneg %p151
      // Predicated region
      $region9: #{tpu_custom_call.1} parent=5 // pred_check
        _
      $region10: #{tpu_custom_call.1} parent=5 // pred_check_branch
        %154 = sbr.rel (%p151) target = $region12
      $region11: #{tpu_custom_call.1} parent=5 // pred_region
        %s155 = ssub.s32 %s12, 1
        // Predicated region
        $region13: #{tpu_custom_call.1} parent=11 // pred_check
          %p156 = pneg %p57
        $region14: #{tpu_custom_call.1} parent=11 // pred_check_branch
          %158 = sbr.rel (%p156) target = $region16
        $region15: #{tpu_custom_call.1} parent=11 // pred_region
          %s159 = smul.u32 4, %s23
          %p160 = scmp.lt.s32.totalorder %s159, 3
          %s161 = scalar_select %p160, %s159, 3
          %s162 = smul.addr %s161, 8
          %s163 = scalar_lea.vmem %s0, %s162
          %s164 = smul.u32 4, %s23
        $region16: #{tpu_custom_call.1} parent=11 // pred_fallthru
          _
        // Predicated region
        $region17: #{tpu_custom_call.1} parent=11 // pred_check
          %p165 = pneg %p111
        $region18: #{tpu_custom_call.1} parent=11 // pred_check_branch
          %167 = sbr.rel (%p165) target = $region20
        $region19: #{tpu_custom_call.1} parent=11 // pred_region
          %s168 = smul.u32 4, %s23
          %p169 = scmp.lt.s32.totalorder %s168, 3
          %s170 = scalar_select %p169, %s168, 3
          %s171 = smul.addr %s170, 8
          %s172 = scalar_lea.vmem %s2, %s171
          %s173 = smul.u32 4, %s23
        $region20: #{tpu_custom_call.1} parent=11 // pred_fallthru
          _
      $region12: #{tpu_custom_call.1} parent=5 // pred_fallthru
        _
      %p174 = scmp.lt.s32.totalorder %s12, 2
      // Predicated region
      $region21: #{tpu_custom_call.1} parent=5 // pred_check
        %p175 = pneg %p174
      $region22: #{tpu_custom_call.1} parent=5 // pred_check_branch
        %177 = sbr.rel (%p175) target = $region24
      $region23: #{tpu_custom_call.1} parent=5 // pred_region
        // Predicated region
        $region25: #{tpu_custom_call.1} parent=23 // pred_check
          %p178 = pneg %p79
        $region26: #{tpu_custom_call.1} parent=23 // pred_check_branch
          %180 = sbr.rel (%p178) target = $region28
        $region27: #{tpu_custom_call.1} parent=23 // pred_region
          %p181 = scmp.lt.s32.totalorder %s19, 1
          %s182 = scalar_select %p181, %s19, 1
          %p183 = scmp.lt.s32.totalorder %s21, 0
          %s184 = scalar_select %p183, %s21, 0
          %s185 = smul.addr %s182, 2
          %s186 = sadd.s32 %s184, %s185
          %s187 = smul.addr %s186, 8
          %s188 = scalar_lea.vmem %s1, %s187
        $region28: #{tpu_custom_call.1} parent=23 // pred_fallthru
          _
      $region24: #{tpu_custom_call.1} parent=5 // pred_fallthru
        _
      %p189 = scmp.le.s32.totalorder 1, %s12
      %p190 = scmp.lt.s32.totalorder %s12, 3
      %p191 = pnand %p189, %p190
      %p192 = pneg %p191
      // Predicated region
      $region29: #{tpu_custom_call.1} parent=5 // pred_check
        _
      $region30: #{tpu_custom_call.1} parent=5 // pred_check_branch
        %194 = sbr.rel (%p191) target = $region32
      $region31: #{tpu_custom_call.1} parent=5 // pred_region
        %s195 = ssub.s32 %s12, 1
        %s196 = smul.u32 4, %s23
        %p197 = scmp.lt.s32.totalorder %s196, 3
        %s198 = scalar_select %p197, %s196, 3
        %s199 = smul.addr %s198, 8
        %s200 = scalar_lea.vmem %s0, %s199
        %p201 = pneg %p57
        %p202 = pneg %p54
        %p203 = scmp.lt.s32.totalorder %s22, 1
        %s204 = scalar_select %p203, %s22, 1
        %p205 = scmp.lt.s32.totalorder %s24, 0
        %s206 = scalar_select %p205, %s24, 0
        %s207 = smul.addr %s204, 2
        %s208 = sadd.s32 %s206, %s207
        %s209 = smul.addr %s208, 8
        %s210 = scalar_lea.vmem %s1, %s209
        %p211 = pneg %p85
        %p212 = pneg %p82
        %s213 = smul.u32 4, %s23
        %p214 = scmp.lt.s32.totalorder %s213, 3
        %s215 = scalar_select %p214, %s213, 3
        %s216 = smul.addr %s215, 8
        %s217 = scalar_lea.vmem %s2, %s216
        %p218 = pneg %p111
        %p219 = pneg %p108
        %p220 = pneg %p141
        %p221 = pneg %p138
        %s222 = sand.u32 %s128, 1
        %s223 = scalar_lea.sflag [#allocation3], %s222
        %s224 = sand.u32 %s128, 1
        %s225 = smul.addr %s224, 32
        %s226 = scalar_lea.vmem [#allocation2], %s225
        %s227 = smul.u32 4, %s23
        %p228 = scmp.lt.s32.totalorder %s227, 3
        %s229 = scalar_select %p228, %s227, 3
        %s230 = smul.addr %s229, 8
        %s231 = scalar_lea.vmem %s0, %s230
        %s232 = smul.u32 4, %s23
        %p233 = scmp.lt.s32.totalorder %s22, 1
        %s234 = scalar_select %p233, %s22, 1
        %p235 = scmp.lt.s32.totalorder %s24, 0
        %s236 = scalar_select %p235, %s24, 0
        %s237 = smul.addr %s234, 2
        %s238 = sadd.s32 %s236, %s237
        %s239 = smul.addr %s238, 8
        %s240 = scalar_lea.vmem %s1, %s239
        %s241 = smul.u32 4, %s23
        %p242 = scmp.lt.s32.totalorder %s241, 3
        %s243 = scalar_select %p242, %s241, 3
        %s244 = smul.addr %s243, 8
        %s245 = scalar_lea.vmem %s2, %s244
        %s246 = smul.u32 4, %s23
        %s247 = smul.u32 4, %s23
        %v248 = vld [vmem:[%s231] sm:$0xff]
        %v249 = vld [vmem:[%s231 + $0x8] sm:$0xff]
        %v250 = vld [vmem:[%s231 + $0x10] sm:$0xff]
        %v251 = vld [vmem:[%s231 + $0x18] sm:$0xff]
        %v252 = vld [vmem:[%s240] sm:$0xff]
        %v253 = vld [vmem:[%s240 + $0x8] sm:$0xff]
        %v254 = vld [vmem:[%s245] sm:$0xff]
        %v255 = vld [vmem:[%s245 + $0x8] sm:$0xff]
        %v256 = vld [vmem:[%s245 + $0x10] sm:$0xff]
        %v257 = vld [vmem:[%s245 + $0x18] sm:$0xff]
        %259 = vset.pattern.permute.xlu0 0
        %260 = vperm.xlu0 %259, %v254
        %v261 = vpop.permute.xlu0 %260
        %264 = vset.pattern.permute.xlu0 0
        %265 = vperm.xlu0 %264, %v255
        %v266 = vpop.permute.xlu0 %265
        %269 = vset.pattern.permute.xlu0 0
        %270 = vperm.xlu0 %269, %v256
        %v271 = vpop.permute.xlu0 %270
        %274 = vset.pattern.permute.xlu0 0
        %275 = vperm.xlu0 %274, %v257
        %v276 = vpop.permute.xlu0 %275
        %vm278 = vcmask 130048
        %v280 = vsel %vm278, %v248, 0
        %v283 = vsel %vm278, %v249, 0
        %v286 = vsel %vm278, %v250, 0
        %v289 = vsel %vm278, %v251, 0
        %291 = vmatprep.subr.mxu0 0.0
        %292 = vmatpush1.msra.mxu0 %v252
        %293 = vmatprep.subr.mxu0 0.0
        %294 = vmatpush1.msra.mxu0 %v253
        %295 = vmatprep.subr.mxu0 0.0
        %296 = vmatpush1.msra.mxu0 0.0
        %297 = vmatprep.subr.mxu0 0.0
        %298 = vmatpush1.msra.mxu0 0.0
        %299 = vmatprep.subr.mxu0 0.0
        %300 = vmatpush1.msra.mxu0 0.0
        %301 = vmatprep.subr.mxu0 0.0
        %302 = vmatpush1.msra.mxu0 0.0
        %303 = vmatprep.subr.mxu0 0.0
        %304 = vmatpush1.msra.mxu0 0.0
        %305 = vmatprep.subr.mxu0 0.0
        %306 = vmatpush1.msra.mxu0 0.0
        %307 = vmatprep.subr.mxu0 0.0
        %308 = vmatpush1.msra.mxu0 0.0
        %309 = vmatprep.subr.mxu0 0.0
        %310 = vmatpush1.msra.mxu0 0.0
        %311 = vmatprep.subr.mxu0 0.0
        %312 = vmatpush1.msra.mxu0 0.0
        %313 = vmatprep.subr.mxu0 0.0
        %314 = vmatpush1.msra.mxu0 0.0
        %315 = vmatprep.subr.mxu0 0.0
        %316 = vmatpush1.msra.mxu0 0.0
        %317 = vmatprep.subr.mxu0 0.0
        %318 = vmatpush1.msra.mxu0 0.0
        %319 = vmatprep.subr.mxu0 0.0
        %320 = vmatpush1.msra.mxu0 0.0
        %321 = vmatprep.subr.mxu0 0.0
        %322 = vmatpush1.msra.mxu0 0.0
        %323 = vmatprep.subr.mxu0 0.0
        %324 = vmatpush1.msra.mxu0 0.0
        %325 = vmatprep.subr.mxu0 0.0
        %326 = vmatpush1.msra.mxu0 0.0
        %327 = vmatprep.subr.mxu0 0.0
        %328 = vmatpush1.msra.mxu0 0.0
        %329 = vmatprep.subr.mxu0 0.0
        %330 = vmatpush1.msra.mxu0 0.0
        %331 = vmatprep.subr.mxu0 0.0
        %332 = vmatpush1.msra.mxu0 0.0
        %333 = vmatprep.subr.mxu0 0.0
        %334 = vmatpush1.msra.mxu0 0.0
        %335 = vmatprep.subr.mxu0 0.0
        %336 = vmatpush1.msra.mxu0 0.0
        %337 = vmatprep.subr.mxu0 0.0
        %338 = vmatpush1.msra.mxu0 0.0
        %339 = vmatprep.subr.mxu0 0.0
        %340 = vmatpush1.msra.mxu0 0.0
        %341 = vmatprep.subr.mxu0 0.0
        %342 = vmatpush1.msra.mxu0 0.0
        %343 = vmatprep.subr.mxu0 0.0
        %344 = vmatpush1.msra.mxu0 0.0
        %345 = vmatprep.subr.mxu0 0.0
        %346 = vmatpush1.msra.mxu0 0.0
        %347 = vmatprep.subr.mxu0 0.0
        %348 = vmatpush1.msra.mxu0 0.0
        %349 = vmatprep.subr.mxu0 0.0
        %350 = vmatpush1.msra.mxu0 0.0
        %351 = vmatprep.subr.mxu0 0.0
        %352 = vmatpush1.msra.mxu0 0.0
        %353 = vmatprep.subr.mxu0 0.0
        %354 = vmatpush1.msra.mxu0 0.0
        %355 = vmatprep.mubr.f32.mxu0 0.0
        %356 = vmatmul.mubr.f32.gmra.mrb[0].mxu0 %v280
        %v357 = vpop.f32.mrb[0].mxu0
        %v358 = vadd.f32 %v261, %v357
        %v359 = vpop.f32.mrb[0].mxu0
        %360 = vmatprep.mubr.f32.mxu0 0.0
        %361 = vmatmul.mubr.f32.gmra.mrb[0].mxu0 %v283
        %v362 = vpop.f32.mrb[0].mxu0
        %v363 = vadd.f32 %v266, %v362
        %v364 = vpop.f32.mrb[0].mxu0
        %365 = vmatprep.mubr.f32.mxu0 0.0
        %366 = vmatmul.mubr.f32.gmra.mrb[0].mxu0 %v286
        %v367 = vpop.f32.mrb[0].mxu0
        %v368 = vadd.f32 %v271, %v367
        %v369 = vpop.f32.mrb[0].mxu0
        %370 = vmatprep.mubr.f32.mxu0 0.0
        %371 = vmatmul.mubr.f32.gmra.mrb[0].mxu0 %v289
        %v372 = vpop.f32.mrb[0].mxu0
        %v373 = vadd.f32 %v276, %v372
        %v374 = vpop.f32.mrb[0].mxu0
        %375 = vdwg.mxu0
        %376 = vst [vmem:[%s226] sm:$0xff] %v358
        %377 = vst [vmem:[%s226 + $0x8] sm:$0xff] %v363
        %378 = vst [vmem:[%s226 + $0x10] sm:$0xff] %v368
        %379 = vst [vmem:[%s226 + $0x18] sm:$0xff] %v373
        %s380 = sand.u32 %s128, 1
        %s381 = scalar_lea.sflag [#allocation3], %s380
        %s382 = sand.u32 %s128, 1
        %s383 = smul.addr %s382, 32
        %s384 = scalar_lea.vmem [#allocation2], %s383
        // Predicated region
        $region33: #{tpu_custom_call.1} parent=31 // pred_check
          %p385 = pneg %p138
        $region34: #{tpu_custom_call.1} parent=31 // pred_check_branch
          %387 = sbr.rel (%p385) target = $region36
        $region35: #{tpu_custom_call.1} parent=31 // pred_region
          %s388 = smul.u32 4, %s23
          %s390 = ssub.s32 512, 512
          %391 = vsyncadd %s381, %s390
          %s392 = sadd.s32 %s24, %s388
          %s393 = smul.addr %s22, 4
          %s394 = sadd.s32 %s392, %s393
          %s395 = smul.addr %s394, 128
          %s396 = scalar_lea.hbm %s3, %s395
          %s397 = sshll.u32 %s384, 4
          %s398 = int_to_ptr.vmem [resolvable:$true] %s397
          %403 = dma.vmem_to_hbm [thread:$0]  %s398, 512, %s396, %s381, 128, 128, 8
        $region36: #{tpu_custom_call.1} parent=31 // pred_fallthru
          _
      $region32: #{tpu_custom_call.1} parent=5 // pred_fallthru
        _
      %p404 = scmp.le.s32.totalorder 2, %s12
      // Predicated region
      $region37: #{tpu_custom_call.1} parent=5 // pred_check
        %p405 = pneg %p404
      $region38: #{tpu_custom_call.1} parent=5 // pred_check_branch
        %407 = sbr.rel (%p405) target = $region40
      $region39: #{tpu_custom_call.1} parent=5 // pred_region
        %s408 = ssub.s32 %s12, 2
        // Predicated region
        $region41: #{tpu_custom_call.1} parent=39 // pred_check
          %p409 = pneg %p144
        $region42: #{tpu_custom_call.1} parent=39 // pred_check_branch
          %411 = sbr.rel (%p409) target = $region44
        $region43: #{tpu_custom_call.1} parent=39 // pred_region
          %s412 = sand.u32 %s129, 1
          %s413 = scalar_lea.sflag [#allocation3], %s412
          %s414 = sand.u32 %s129, 1
          %s415 = smul.addr %s414, 32
          %s416 = scalar_lea.vmem [#allocation2], %s415
          %417 = dma.done %s413, 512
        $region44: #{tpu_custom_call.1} parent=39 // pred_fallthru
          _
      $region40: #{tpu_custom_call.1} parent=5 // pred_fallthru
        _
    $region6: #{tpu_custom_call.1} parent=1 // loop_footer
      %s16 = sadd.s32 1, %s12
    $region7: #{tpu_custom_call.1} parent=1 // loop_footer_branch
      %11 = sbr.rel target = $region3
    $region8: #{tpu_custom_call.1} parent=1 // loop_exit
      _
    %418 = vsyncpa [#allocation3], 1
    %s419 = scalar_lea.sflag [#allocation3], 1
    %420 = vsyncpa %s419, 1

</llo_original>
